<compile_context>
chip_gen: v7x
topology: tpu7x:2x2x1
jax: 0.10.0
libtpu: 0.0.40
codegen_flags: <defaults>
</compile_context>

<pallas_src>
import functools

import jax
import jax.numpy as jnp
from jax.experimental import pallas as pl
from jax.experimental.pallas import tpu as pltpu

_MIB = 1024 * 1024


def _round_up(n, m):
    return ((n + m - 1) // m) * m


def _vmem_limit_bytes(tb, x_itemsize):
    # Per-step footprint, lane-padded to 128: x block (double-buffered),
    # f32 output block (double-buffered), and a few f32 temporaries for
    # h / logits / exp.  Weights are ~5 KiB and negligible.
    lane = 128
    est = tb * lane * (2 * x_itemsize + 2 * 4 + 3 * 4) + 2 * _MIB
    # 1.5x headroom; floor 32 MiB (v5e's default scoped VMEM is only 16 MiB),
    # ceiling 100 MiB (inside v5e/v6e's 128 MiB physical; at the default
    # block_b<=8192 actual use is ~30 MiB, well inside v7x's 64 MiB per TC).
    return int(min(max(int(est * 1.5), 32 * _MIB), 100 * _MIB))


def _mlp_softmax_kernel(x_ref, w1_ref, b1_ref, w2_ref, b2_ref, o_ref):
    # Hidden layer: Linear + ReLU.  Inputs (f32 or bf16) feed the MXU directly,
    # which widens; accumulation is f32.
    h = jnp.dot(x_ref[...], w1_ref[...], preferred_element_type=jnp.float32)
    h = jnp.maximum(h + b1_ref[...].astype(jnp.float32), 0.0)

    # TODO(synk): training-mode dropout (pltpu.prng_seed + pltpu.prng_random_bits
    # mask scaled by 1/(1-p)) not emitted; nn.Dropout(0.1) is identity in
    # eval mode (predict / predict_proba), which is the forward implemented here.

    # Output layer: Linear.
    logits = jnp.dot(h, w2_ref[...].astype(jnp.float32),
                     preferred_element_type=jnp.float32)
    logits = logits + b2_ref[...].astype(jnp.float32)

    # Numerically stable softmax over the class axis (== torch Softmax(dim=1)).
    m = jnp.max(logits, axis=-1, keepdims=True)
    e = jnp.exp(logits - m)
    denom = jnp.sum(e, axis=-1, keepdims=True)
    # Exact divide: rows sum to 1 to f32 precision.  (The previous
    # pl.reciprocal(approx=True) failed the sum-to-1 tolerance; the kernel is
    # memory-bound so the exact divide costs nothing on the wall clock.)
    o_ref[...] = (e / denom).astype(o_ref.dtype)


@functools.partial(jax.jit, static_argnames=("block_b",))
def dnn_classifier_forward(x, w1, b1, w2, b2, *, block_b=8192):
    """x: [B, input_dim] (f32 or bf16) -> probs: [B, num_classes] float32.

    Batch-tiled grid; weights VMEM-resident via constant index maps (DMA'd
    once, reused every grid step).  No input padding / output slicing: the
    final partial block is handled by Pallas's masked writeback.
    """
    B, F = x.shape
    H = w1.shape[1]
    C = w2.shape[1]
    b1_2d = b1.reshape(1, H)
    b2_2d = b2.reshape(1, C)

    # Batch tile: second-to-last block dim must be a multiple of 8 (the block
    # may overhang the array; OOB writes are masked).  Default block_b=8192 is
    # sized for v7x's 64 MiB per-TC VMEM with f32 x (bf16 x allows 16384).
    tb = min(block_b, _round_up(B, 8))
    if B >= 4 * 1024:
        # Keep >= ~4 grid steps at large B so both v7x TensorCores get >= 2
        # tiles each (load balance + double buffering); harmless on v5e/v6e.
        tb = min(tb, _round_up(pl.cdiv(B, 4), 8))
    grid = (pl.cdiv(B, tb),)

    out = pl.pallas_call(
        _mlp_softmax_kernel,
        out_shape=jax.ShapeDtypeStruct((B, C), jnp.float32),
        grid=grid,
        in_specs=[
            pl.BlockSpec((tb, F), lambda i: (i, 0)),   # x: batch-tiled stream
            pl.BlockSpec((F, H), lambda i: (0, 0)),    # w1: VMEM-resident
            pl.BlockSpec((1, H), lambda i: (0, 0)),    # b1: VMEM-resident
            pl.BlockSpec((H, C), lambda i: (0, 0)),    # w2: VMEM-resident
            pl.BlockSpec((1, C), lambda i: (0, 0)),    # b2: VMEM-resident
        ],
        out_specs=pl.BlockSpec((tb, C), lambda i: (i, 0)),
        compiler_params=pltpu.CompilerParams(
            dimension_semantics=("parallel",),
            vmem_limit_bytes=_vmem_limit_bytes(tb, jnp.dtype(x.dtype).itemsize),
        ),
    )(x, w1, b1_2d, w2, b2_2d)
    return out


def init_params(key, input_dim=12, hidden_dim=64, num_classes=7):
    """Deterministic synthetic parameters (PyTorch-style uniform fan-in init)."""
    k1, k2, k3, k4 = jax.random.split(key, 4)
    bound1 = 1.0 / jnp.sqrt(input_dim)
    bound2 = 1.0 / jnp.sqrt(hidden_dim)
    w1 = jax.random.uniform(k1, (input_dim, hidden_dim), jnp.float32, -bound1, bound1)
    b1 = jax.random.uniform(k2, (hidden_dim,), jnp.float32, -bound1, bound1)
    w2 = jax.random.uniform(k3, (hidden_dim, num_classes), jnp.float32, -bound2, bound2)
    b2 = jax.random.uniform(k4, (num_classes,), jnp.float32, -bound2, bound2)
    return w1, b1, w2, b2


def reference_forward(x, w1, b1, w2, b2):
    h = jnp.maximum(x.astype(jnp.float32) @ w1.astype(jnp.float32)
                    + b1.astype(jnp.float32), 0.0)
    logits = h @ w2.astype(jnp.float32) + b2.astype(jnp.float32)
    return jax.nn.softmax(logits, axis=1)


if __name__ == "__main__":
    key = jax.random.PRNGKey(0)
    kx, kp = jax.random.split(key)

    B, INPUT_DIM, HIDDEN_DIM, NUM_CLASSES = 16, 12, 64, 7
    x = jax.random.normal(kx, (B, INPUT_DIM), dtype=jnp.float32)
    w1, b1, w2, b2 = init_params(kp, INPUT_DIM, HIDDEN_DIM, NUM_CLASSES)
    ref = reference_forward(x, w1, b1, w2, b2)

    # 1) f32 path, single grid step (B=16 -> one 16-row tile).
    probs = jax.block_until_ready(dnn_classifier_forward(x, w1, b1, w2, b2))
    assert probs.shape == (B, NUM_CLASSES)
    assert bool(jnp.allclose(probs, ref, atol=1e-3, rtol=1e-3))
    assert bool(jnp.allclose(jnp.sum(probs, axis=1), jnp.ones((B,)), atol=1e-3))

    # 2) Non-multiple batch with a multi-step grid (exercises the no-pad
    #    partial-final-block path): B=50, tile=16 -> grid=(4,), last block has 2 rows.
    B2 = 50
    x2 = jax.random.normal(jax.random.PRNGKey(1), (B2, INPUT_DIM), dtype=jnp.float32)
    probs2 = jax.block_until_ready(
        dnn_classifier_forward(x2, w1, b1, w2, b2, block_b=16))
    ref2 = reference_forward(x2, w1, b1, w2, b2)
    assert probs2.shape == (B2, NUM_CLASSES)
    assert not bool(jnp.any(jnp.isnan(probs2)))          # no NaN leak from padded rows
    assert bool(jnp.allclose(probs2, ref2, atol=1e-3, rtol=1e-3))
    assert bool(jnp.allclose(jnp.sum(probs2, axis=1), jnp.ones((B2,)), atol=1e-3))

    # 3) Larger batch hitting the ">= 4 grid steps" tile-capping branch.
    B3 = 6000
    x3 = jax.random.normal(jax.random.PRNGKey(2), (B3, INPUT_DIM), dtype=jnp.float32)
    probs3 = jax.block_until_ready(dnn_classifier_forward(x3, w1, b1, w2, b2))
    ref3 = reference_forward(x3, w1, b1, w2, b2)
    assert probs3.shape == (B3, NUM_CLASSES)
    assert not bool(jnp.any(jnp.isnan(probs3)))
    assert bool(jnp.allclose(probs3, ref3, atol=1e-3, rtol=1e-3))

    # 4) bf16 input path (halves the dominant HBM stream at large B); softmax
    #    math stays f32 and the divide is exact, so rows still sum to 1.
    probs_bf16 = jax.block_until_ready(
        dnn_classifier_forward(
            x.astype(jnp.bfloat16), w1.astype(jnp.bfloat16), b1.astype(jnp.bfloat16),
            w2.astype(jnp.bfloat16), b2.astype(jnp.bfloat16)))
    assert probs_bf16.shape == (B, NUM_CLASSES)
    assert bool(jnp.allclose(probs_bf16, ref, atol=5e-2))
    assert bool(jnp.allclose(jnp.sum(probs_bf16, axis=1), jnp.ones((B,)), atol=2e-3))

    print("KERNEL_OK")
</pallas_src>

<mosaic_0001>
module attributes {stable_mosaic.version = 11 : i64} {
  func.func @_mlp_softmax_kernel(%arg0: i32, %arg1: memref<16x12xf32, #tpu.memory_space<vmem>>, %arg2: memref<12x64xf32, #tpu.memory_space<vmem>>, %arg3: memref<1x64xf32, #tpu.memory_space<vmem>>, %arg4: memref<64x7xf32, #tpu.memory_space<vmem>>, %arg5: memref<1x7xf32, #tpu.memory_space<vmem>>, %arg6: memref<16x7xf32, #tpu.memory_space<vmem>>) attributes {dimension_semantics = [#tpu.dimension_semantics<parallel>], iteration_bounds = array<i64: 1>, scalar_prefetch = 0 : i64, scratch_operands = 0 : i64, tpu.core_type = #tpu.core_type<tc>, window_params = [{transform_indices = @transform_0, window_bounds = array<i64: 16, 12>}, {pipeline_mode = #tpu.pipeline_mode<synchronous>, transform_indices = @transform_1, window_bounds = array<i64: 12, 64>}, {pipeline_mode = #tpu.pipeline_mode<synchronous>, transform_indices = @transform_2, window_bounds = array<i64: 1, 64>}, {pipeline_mode = #tpu.pipeline_mode<synchronous>, transform_indices = @transform_3, window_bounds = array<i64: 64, 7>}, {pipeline_mode = #tpu.pipeline_mode<synchronous>, transform_indices = @transform_4, window_bounds = array<i64: 1, 7>}, {transform_indices = @transform_5, window_bounds = array<i64: 16, 7>}]} {
    %c0 = arith.constant 0 : index
    %c0_0 = arith.constant 0 : index
    %0 = vector.load %arg1[%c0, %c0_0] : memref<16x12xf32, #tpu.memory_space<vmem>>, vector<16x12xf32>
    %c0_1 = arith.constant 0 : index
    %c0_2 = arith.constant 0 : index
    %1 = vector.load %arg2[%c0_1, %c0_2] : memref<12x64xf32, #tpu.memory_space<vmem>>, vector<12x64xf32>
    %cst = arith.constant dense<0.000000e+00> : vector<16x64xf32>
    %2 = tpu.matmul %0, %1, %cst {dimension_numbers = #tpu.dot_dimension_numbers<[1], [0], [0], [1], [0, 0, 1, 1], [], []>} : vector<16x12xf32>, vector<12x64xf32>, vector<16x64xf32> -> vector<16x64xf32>
    %c0_3 = arith.constant 0 : index
    %c0_4 = arith.constant 0 : index
    %3 = vector.load %arg3[%c0_3, %c0_4] : memref<1x64xf32, #tpu.memory_space<vmem>>, vector<1x64xf32>
    %4 = vector.broadcast %3 : vector<1x64xf32> to vector<16x64xf32>
    %5 = arith.addf %2, %4 : vector<16x64xf32>
    %cst_5 = arith.constant 0.000000e+00 : f32
    %6 = vector.broadcast %cst_5 : f32 to vector<16x64xf32>
    %7 = arith.maximumf %5, %6 : vector<16x64xf32>
    %c0_6 = arith.constant 0 : index
    %c0_7 = arith.constant 0 : index
    %8 = vector.load %arg4[%c0_6, %c0_7] : memref<64x7xf32, #tpu.memory_space<vmem>>, vector<64x7xf32>
    %cst_8 = arith.constant dense<0.000000e+00> : vector<16x7xf32>
    %9 = tpu.matmul %7, %8, %cst_8 {dimension_numbers = #tpu.dot_dimension_numbers<[1], [0], [0], [1], [0, 0, 1, 1], [], []>} : vector<16x64xf32>, vector<64x7xf32>, vector<16x7xf32> -> vector<16x7xf32>
    %c0_9 = arith.constant 0 : index
    %c0_10 = arith.constant 0 : index
    %10 = vector.load %arg5[%c0_9, %c0_10] : memref<1x7xf32, #tpu.memory_space<vmem>>, vector<1x7xf32>
    %11 = vector.broadcast %10 : vector<1x7xf32> to vector<16x7xf32>
    %12 = arith.addf %9, %11 : vector<16x7xf32>
    %cst_11 = arith.constant dense<0xFF800000> : vector<16xf32>
    %13 = vector.multi_reduction <maximumf>, %12, %cst_11 [1] : vector<16x7xf32> to vector<16xf32>
    %14 = vector.shape_cast %13 : vector<16xf32> to vector<16x1xf32>
    %15 = vector.broadcast %14 : vector<16x1xf32> to vector<16x7xf32>
    %16 = arith.subf %12, %15 : vector<16x7xf32>
    %17 = math.exp %16 : vector<16x7xf32>
    %cst_12 = arith.constant dense<0.000000e+00> : vector<16xf32>
    %18 = vector.multi_reduction <add>, %17, %cst_12 [1] : vector<16x7xf32> to vector<16xf32>
    %19 = vector.shape_cast %18 : vector<16xf32> to vector<16x1xf32>
    %20 = vector.broadcast %19 : vector<16x1xf32> to vector<16x7xf32>
    %21 = arith.divf %17, %20 : vector<16x7xf32>
    %c0_13 = arith.constant 0 : index
    %c0_14 = arith.constant 0 : index
    %22 = vector.load %arg6[%c0_13, %c0_14] : memref<16x7xf32, #tpu.memory_space<vmem>>, vector<16x7xf32>
    tpu.vector_store %arg6[%c0_13, %c0_14], %21 {strides = array<i32>} : memref<16x7xf32, #tpu.memory_space<vmem>>, vector<16x7xf32>,
    return
  }
  func.func @transform_0(%arg0: i32) -> (i32, i32) {
    %c0_i32 = arith.constant 0 : i32
    %c0_i32_0 = arith.constant 0 : i32
    return %arg0, %c0_i32 : i32, i32
  }
  func.func @transform_1(%arg0: i32) -> (i32, i32) {
    %c0_i32 = arith.constant 0 : i32
    %c0_i32_0 = arith.constant 0 : i32
    %c0_i32_1 = arith.constant 0 : i32
    return %c0_i32, %c0_i32_0 : i32, i32
  }
  func.func @transform_2(%arg0: i32) -> (i32, i32) {
    %c0_i32 = arith.constant 0 : i32
    %c0_i32_0 = arith.constant 0 : i32
    %c0_i32_1 = arith.constant 0 : i32
    return %c0_i32, %c0_i32_0 : i32, i32
  }
  func.func @transform_3(%arg0: i32) -> (i32, i32) {
    %c0_i32 = arith.constant 0 : i32
    %c0_i32_0 = arith.constant 0 : i32
    %c0_i32_1 = arith.constant 0 : i32
    return %c0_i32, %c0_i32_0 : i32, i32
  }
  func.func @transform_4(%arg0: i32) -> (i32, i32) {
    %c0_i32 = arith.constant 0 : i32
    %c0_i32_0 = arith.constant 0 : i32
    %c0_i32_1 = arith.constant 0 : i32
    return %c0_i32, %c0_i32_0 : i32, i32
  }
  func.func @transform_5(%arg0: i32) -> (i32, i32) {
    %c0_i32 = arith.constant 0 : i32
    %c0_i32_0 = arith.constant 0 : i32
    return %arg0, %c0_i32 : i32, i32
  }
}

</mosaic_0001>

<llo_original>
// kernel: dnn_classifier_forward.1
$region0: #{dnn_classifier_forward.1}
  #allocation0 [shape = 'u32[]', space=smem, size = 0x4, offset = 0x4, fixed_abs, tag = 'smem constant byte address 0x4 - core index']
  #allocation1 [shape = 'u32[144,128]{1,0:T(1,128)}', space=vmem, size = 0x12000, scoped, tag = 'internal scratch']
  %s0 = inlined_call_operand.vmem [shape: f32[16,12], index: 0, kind: input, shape index: {}]
  %s1 = inlined_call_operand.vmem [shape: f32[12,64], index: 1, kind: input, shape index: {}]
  %s2 = inlined_call_operand.vmem [shape: f32[1,64], index: 2, kind: input, shape index: {}]
  %s3 = inlined_call_operand.vmem [shape: f32[64,7], index: 3, kind: input, shape index: {}]
  %s4 = inlined_call_operand.vmem [shape: f32[1,7], index: 4, kind: input, shape index: {}]
  %s5 = inlined_call_operand.vmem [shape: f32[16,7], index: 5, kind: output, shape index: {}]
  %s6 = sld [smem:[#allocation0]]
  $region30: #{dnn_classifier_forward.1} parent=0
    _
  %s8 = ssub.s32 1, %s6
  %s9 = scalar_select 0, %s8, %s6
  // Predicated region
  $region2: #{dnn_classifier_forward.1} parent=0 // pred_check
    _
  $region3: #{dnn_classifier_forward.1} parent=0 // pred_check_branch
    %11 = sbr.rel (0) target = $region5
  $region4: #{dnn_classifier_forward.1} parent=0 // pred_region
    _
  $region5: #{dnn_classifier_forward.1} parent=0 // pred_fallthru
    _
  // Predicated region
  $region6: #{dnn_classifier_forward.1} parent=0 // pred_check
    _
  $region7: #{dnn_classifier_forward.1} parent=0 // pred_check_branch
    %13 = sbr.rel (0) target = $region9
  $region8: #{dnn_classifier_forward.1} parent=0 // pred_region
    _
  $region9: #{dnn_classifier_forward.1} parent=0 // pred_fallthru
    _
  // Predicated region
  $region10: #{dnn_classifier_forward.1} parent=0 // pred_check
    _
  $region11: #{dnn_classifier_forward.1} parent=0 // pred_check_branch
    %15 = sbr.rel (0) target = $region13
  $region12: #{dnn_classifier_forward.1} parent=0 // pred_region
    _
  $region13: #{dnn_classifier_forward.1} parent=0 // pred_fallthru
    _
  // Predicated region
  $region14: #{dnn_classifier_forward.1} parent=0 // pred_check
    _
  $region15: #{dnn_classifier_forward.1} parent=0 // pred_check_branch
    %17 = sbr.rel (0) target = $region17
  $region16: #{dnn_classifier_forward.1} parent=0 // pred_region
    _
  $region17: #{dnn_classifier_forward.1} parent=0 // pred_fallthru
    _
  // Predicated region
  $region18: #{dnn_classifier_forward.1} parent=0 // pred_check
    _
  $region19: #{dnn_classifier_forward.1} parent=0 // pred_check_branch
    %19 = sbr.rel (0) target = $region21
  $region20: #{dnn_classifier_forward.1} parent=0 // pred_region
    _
  $region21: #{dnn_classifier_forward.1} parent=0 // pred_fallthru
    _
  %v20 = vld [vmem:[%s0] sm:$0xff]
  %v21 = vld [vmem:[%s0 + $0x8] sm:$0xff]
  %v22 = vld [vmem:[%s1] sm:$0xff]
  %v23 = vld [vmem:[%s1 + $0x8] sm:$0xf]
  %v24 = vld [vmem:[%s2] sm:$0x1]
  %v26 = vlaneseq
  %v27 = vshrl.u32 %v26, 7
  %v28 = vsub.s32 0, %v27
  %v29 = vrot.slane %v24, %v28
  %vm31 = vcmask 97280
  %v33 = vsel %vm31, %v20, 0
  %v36 = vsel %vm31, %v21, 0
  %vm38 = vcmask 1043456
  %v40 = vsel %vm38, %v23, 0
  %42 = vmatprep.subr.mxu0 0.0
  %43 = vmatpush1.msra.mxu0 %v22
  %44 = vmatprep.subr.mxu0 0.0
  %45 = vmatpush1.msra.mxu0 %v40
  %46 = vmatprep.subr.mxu0 0.0
  %47 = vmatpush1.msra.mxu0 0.0
  %48 = vmatprep.subr.mxu0 0.0
  %49 = vmatpush1.msra.mxu0 0.0
  %50 = vmatprep.subr.mxu0 0.0
  %51 = vmatpush1.msra.mxu0 0.0
  %52 = vmatprep.subr.mxu0 0.0
  %53 = vmatpush1.msra.mxu0 0.0
  %54 = vmatprep.subr.mxu0 0.0
  %55 = vmatpush1.msra.mxu0 0.0
  %56 = vmatprep.subr.mxu0 0.0
  %57 = vmatpush1.msra.mxu0 0.0
  %58 = vmatprep.subr.mxu0 0.0
  %59 = vmatpush1.msra.mxu0 0.0
  %60 = vmatprep.subr.mxu0 0.0
  %61 = vmatpush1.msra.mxu0 0.0
  %62 = vmatprep.subr.mxu0 0.0
  %63 = vmatpush1.msra.mxu0 0.0
  %64 = vmatprep.subr.mxu0 0.0
  %65 = vmatpush1.msra.mxu0 0.0
  %66 = vmatprep.subr.mxu0 0.0
  %67 = vmatpush1.msra.mxu0 0.0
  %68 = vmatprep.subr.mxu0 0.0
  %69 = vmatpush1.msra.mxu0 0.0
  %70 = vmatprep.subr.mxu0 0.0
  %71 = vmatpush1.msra.mxu0 0.0
  %72 = vmatprep.subr.mxu0 0.0
  %73 = vmatpush1.msra.mxu0 0.0
  %74 = vmatprep.subr.mxu0 0.0
  %75 = vmatpush1.msra.mxu0 0.0
  %76 = vmatprep.subr.mxu0 0.0
  %77 = vmatpush1.msra.mxu0 0.0
  %78 = vmatprep.subr.mxu0 0.0
  %79 = vmatpush1.msra.mxu0 0.0
  %80 = vmatprep.subr.mxu0 0.0
  %81 = vmatpush1.msra.mxu0 0.0
  %82 = vmatprep.subr.mxu0 0.0
  %83 = vmatpush1.msra.mxu0 0.0
  %84 = vmatprep.subr.mxu0 0.0
  %85 = vmatpush1.msra.mxu0 0.0
  %86 = vmatprep.subr.mxu0 0.0
  %87 = vmatpush1.msra.mxu0 0.0
  %88 = vmatprep.subr.mxu0 0.0
  %89 = vmatpush1.msra.mxu0 0.0
  %90 = vmatprep.subr.mxu0 0.0
  %91 = vmatpush1.msra.mxu0 0.0
  %92 = vmatprep.subr.mxu0 0.0
  %93 = vmatpush1.msra.mxu0 0.0
  %94 = vmatprep.subr.mxu0 0.0
  %95 = vmatpush1.msra.mxu0 0.0
  %96 = vmatprep.subr.mxu0 0.0
  %97 = vmatpush1.msra.mxu0 0.0
  %98 = vmatprep.subr.mxu0 0.0
  %99 = vmatpush1.msra.mxu0 0.0
  %100 = vmatprep.subr.mxu0 0.0
  %101 = vmatpush1.msra.mxu0 0.0
  %102 = vmatprep.subr.mxu0 0.0
  %103 = vmatpush1.msra.mxu0 0.0
  %104 = vmatprep.subr.mxu0 0.0
  %105 = vmatpush1.msra.mxu0 0.0
  %106 = vmatprep.mubr.f32.mxu0 0.0
  %107 = vmatmul.mubr.f32.gmra.mrb[0].mxu0 %v33
  %v108 = vpop.f32.mrb[0].mxu0
  %v109 = vadd.f32 %v29, %v108
  %v110 = vpop.f32.mrb[0].mxu0
  %111 = vmatprep.mubr.f32.mxu0 0.0
  %112 = vmatmul.mubr.f32.gmra.mrb[0].mxu0 %v36
  %v113 = vpop.f32.mrb[0].mxu0
  %v114 = vadd.f32 %v29, %v113
  %v115 = vpop.f32.mrb[0].mxu0
  %116 = vdwg.mxu0
  %v117 = vmax.f32 %v109, 0.0
  %v118 = vmax.f32 %v114, 0.0
  %v119 = vld [vmem:[%s3] sm:$0xff]
  %v120 = vld [vmem:[%s3 + $0x8] sm:$0xff]
  %v121 = vld [vmem:[%s3 + $0x10] sm:$0xff]
  %v122 = vld [vmem:[%s3 + $0x18] sm:$0xff]
  %v123 = vld [vmem:[%s3 + $0x20] sm:$0xff]
  %v124 = vld [vmem:[%s3 + $0x28] sm:$0xff]
  %v125 = vld [vmem:[%s3 + $0x30] sm:$0xff]
  %v126 = vld [vmem:[%s3 + $0x38] sm:$0xff]
  %v127 = vld [vmem:[%s4] sm:$0x1]
  %v129 = vlaneseq
  %v130 = vshrl.u32 %v129, 7
  %v131 = vsub.s32 0, %v130
  %v132 = vrot.slane %v127, %v131
  %vm134 = vcmask 523264
  %v136 = vsel %vm134, %v117, 0
  %v139 = vsel %vm134, %v118, 0
  %141 = vmatprep.subr.mxu0 0.0
  %142 = vmatpush1.msra.mxu0 %v119
  %143 = vmatprep.subr.mxu0 0.0
  %144 = vmatpush1.msra.mxu0 %v120
  %145 = vmatprep.subr.mxu0 0.0
  %146 = vmatpush1.msra.mxu0 %v121
  %147 = vmatprep.subr.mxu0 0.0
  %148 = vmatpush1.msra.mxu0 %v122
  %149 = vmatprep.subr.mxu0 0.0
  %150 = vmatpush1.msra.mxu0 %v123
  %151 = vmatprep.subr.mxu0 0.0
  %152 = vmatpush1.msra.mxu0 %v124
  %153 = vmatprep.subr.mxu0 0.0
  %154 = vmatpush1.msra.mxu0 %v125
  %155 = vmatprep.subr.mxu0 0.0
  %156 = vmatpush1.msra.mxu0 %v126
  %157 = vmatprep.subr.mxu0 0.0
  %158 = vmatpush1.msra.mxu0 0.0
  %159 = vmatprep.subr.mxu0 0.0
  %160 = vmatpush1.msra.mxu0 0.0
  %161 = vmatprep.subr.mxu0 0.0
  %162 = vmatpush1.msra.mxu0 0.0
  %163 = vmatprep.subr.mxu0 0.0
  %164 = vmatpush1.msra.mxu0 0.0
  %165 = vmatprep.subr.mxu0 0.0
  %166 = vmatpush1.msra.mxu0 0.0
  %167 = vmatprep.subr.mxu0 0.0
  %168 = vmatpush1.msra.mxu0 0.0
  %169 = vmatprep.subr.mxu0 0.0
  %170 = vmatpush1.msra.mxu0 0.0
  %171 = vmatprep.subr.mxu0 0.0
  %172 = vmatpush1.msra.mxu0 0.0
  %173 = vmatprep.subr.mxu0 0.0
  %174 = vmatpush1.msra.mxu0 0.0
  %175 = vmatprep.subr.mxu0 0.0
  %176 = vmatpush1.msra.mxu0 0.0
  %177 = vmatprep.subr.mxu0 0.0
  %178 = vmatpush1.msra.mxu0 0.0
  %179 = vmatprep.subr.mxu0 0.0
  %180 = vmatpush1.msra.mxu0 0.0
  %181 = vmatprep.subr.mxu0 0.0
  %182 = vmatpush1.msra.mxu0 0.0
  %183 = vmatprep.subr.mxu0 0.0
  %184 = vmatpush1.msra.mxu0 0.0
  %185 = vmatprep.subr.mxu0 0.0
  %186 = vmatpush1.msra.mxu0 0.0
  %187 = vmatprep.subr.mxu0 0.0
  %188 = vmatpush1.msra.mxu0 0.0
  %189 = vmatprep.subr.mxu0 0.0
  %190 = vmatpush1.msra.mxu0 0.0
  %191 = vmatprep.subr.mxu0 0.0
  %192 = vmatpush1.msra.mxu0 0.0
  %193 = vmatprep.subr.mxu0 0.0
  %194 = vmatpush1.msra.mxu0 0.0
  %195 = vmatprep.subr.mxu0 0.0
  %196 = vmatpush1.msra.mxu0 0.0
  %197 = vmatprep.subr.mxu0 0.0
  %198 = vmatpush1.msra.mxu0 0.0
  %199 = vmatprep.subr.mxu0 0.0
  %200 = vmatpush1.msra.mxu0 0.0
  %201 = vmatprep.subr.mxu0 0.0
  %202 = vmatpush1.msra.mxu0 0.0
  %203 = vmatprep.subr.mxu0 0.0
  %204 = vmatpush1.msra.mxu0 0.0
  %205 = vmatprep.mubr.f32.mxu0 0.0
  %206 = vmatmul.mubr.f32.gmra.mrb[0].mxu0 %v136
  %v207 = vpop.f32.mrb[0].mxu0
  %v208 = vadd.f32 %v132, %v207
  %v209 = vpop.f32.mrb[0].mxu0
  %210 = vmatprep.mubr.f32.mxu0 0.0
  %211 = vmatmul.mubr.f32.gmra.mrb[0].mxu0 %v139
  %v212 = vpop.f32.mrb[0].mxu0
  %v213 = vadd.f32 %v132, %v212
  %v214 = vpop.f32.mrb[0].mxu0
  %215 = vdwg.mxu0
  %vm216 = vcmask 56320
  %v217 = vsel %vm216, %v208, -inf
  %218 = vmax.xlane.f32.xlu0 %v217
  %v219 = vpop.xlane.xlu0 %218
  %v220 = vsel %vm216, %v213, -inf
  %221 = vmax.xlane.f32.xlu0 %v220
  %v222 = vpop.xlane.xlu0 %221
  %v223 = vsub.f32 %v208, %v219
  %v224 = vsub.f32 %v213, %v222
  %v225 = vmul.f32 %v223, 1.442695
  %v226 = vpow.pop %v225
  %v227 = vmul.f32 %v224, 1.442695
  %v228 = vpow.pop %v227
  %v229 = vsel %vm216, %v226, 0.0
  %230 = vadd.xlane.f32.xlu0 %v229
  %v231 = vpop.xlane.xlu0 %230
  %v232 = vsel %vm216, %v228, 0.0
  %233 = vadd.xlane.f32.xlu0 %v232
  %v234 = vpop.xlane.xlu0 %233
  %v235 = vrcp.pop %v231
  %v236 = vmul.f32 %v226, %v235
  %v237 = vrcp.pop %v234
  %v238 = vmul.f32 %v228, %v237
  %239 = vst.msk [vmem:[%s5] sm:$0xff] %vm216, %v236
  %240 = vst.msk [vmem:[%s5 + $0x8] sm:$0xff] %vm216, %v238
  // Predicated region
  $region22: #{dnn_classifier_forward.1} parent=0 // pred_check
    _
  $region23: #{dnn_classifier_forward.1} parent=0 // pred_check_branch
    %242 = sbr.rel (0) target = $region25
  $region24: #{dnn_classifier_forward.1} parent=0 // pred_region
    _
  $region25: #{dnn_classifier_forward.1} parent=0 // pred_fallthru
    _
  // Predicated region
  $region26: #{dnn_classifier_forward.1} parent=0 // pred_check
    _
  $region27: #{dnn_classifier_forward.1} parent=0 // pred_check_branch
    %244 = sbr.rel (0) target = $region29
  $region28: #{dnn_classifier_forward.1} parent=0 // pred_region
    _
  $region29: #{dnn_classifier_forward.1} parent=0 // pred_fallthru
    _

</llo_original>
